<compile_context>
chip_gen: v6e
topology: v6e:2x2x1
jax: 0.10.0
libtpu: 0.0.40
codegen_flags: <defaults>
</compile_context>

<pallas_src>
import jax
import jax.numpy as jnp
from jax.experimental import pallas as pl
from jax.experimental.pallas import tpu as pltpu

_LANES = 128
# ~2 MiB per block: big enough to amortize the ~0.35 us per-grid-step overhead
# against v7x's ~3.2 TB/s HBM, still tiny vs. the 32 MiB scoped VMEM default
# (in+out, double-buffered -> ~8 MiB).
_BLOCK_TARGET_BYTES = 2 << 20


def _copy_kernel(x_ref, o_ref):
    # Elementwise pass-through on the VPU; lane-dense block -> unmasked vst.
    o_ref[...] = x_ref[...]


def model_forward(x):
    """Faithful Pallas equivalent of Model.forward (empty body -> None)."""
    del x
    return None


def _min_sublanes(dtype):
    # The (8, 128) minimum tile only holds for 32-bit dtypes; packed dtypes
    # need (16, 128) for 16-bit and (32, 128) for 8-bit.
    itemsize = jnp.dtype(dtype).itemsize
    return max(8, 32 // itemsize)


def _pick_block_rows(padded_rows, sublanes, max_rows):
    # Largest divisor of padded_rows that is a multiple of `sublanes` and
    # <= max_rows.  padded_rows is a multiple of `sublanes`, so one exists.
    d = max(sublanes, (max_rows // sublanes) * sublanes)
    while d >= sublanes:
        if padded_rows % d == 0:
            return d
        d -= sublanes
    return sublanes


@jax.jit
def pallas_passthrough(x):
    """Identity smoke-test kernel: lane-dense layout, aliased, jitted."""
    orig_shape = x.shape
    total = x.size
    dtype = x.dtype
    itemsize = jnp.dtype(dtype).itemsize
    sublanes = _min_sublanes(dtype)

    # Lane-dense 2-D slab: last dim = 128 lanes, rows a multiple of the
    # dtype's minimum sublane count.
    rows = pl.cdiv(total, _LANES)
    padded_rows = pl.cdiv(rows, sublanes) * sublanes
    padded_total = padded_rows * _LANES

    flat = jnp.ravel(x)
    needs_pad = padded_total != total
    if needs_pad:
        # Only hit for awkward shapes; fused under jit with the pallas_call.
        flat = jnp.pad(flat, (0, padded_total - total))
    slab = flat.reshape(padded_rows, _LANES)

    max_block_rows = max(
        sublanes,
        (_BLOCK_TARGET_BYTES // (_LANES * itemsize) // sublanes) * sublanes,
    )

    if padded_rows <= max_block_rows:
        # Single-block fast path: no grid / pipelining machinery at all.
        out = pl.pallas_call(
            _copy_kernel,
            out_shape=jax.ShapeDtypeStruct(slab.shape, slab.dtype),
            in_specs=[pl.BlockSpec(memory_space=pltpu.MemorySpace.VMEM)],
            out_specs=pl.BlockSpec(memory_space=pltpu.MemorySpace.VMEM),
            input_output_aliases={0: 0},
        )(slab)
    else:
        block_rows = _pick_block_rows(padded_rows, sublanes, max_block_rows)
        grid = (padded_rows // block_rows,)
        out = pl.pallas_call(
            _copy_kernel,
            out_shape=jax.ShapeDtypeStruct(slab.shape, slab.dtype),
            grid=grid,
            in_specs=[
                pl.BlockSpec(
                    (block_rows, _LANES),
                    lambda i: (i, 0),
                    memory_space=pltpu.MemorySpace.VMEM,
                )
            ],
            out_specs=pl.BlockSpec(
                (block_rows, _LANES),
                lambda i: (i, 0),
                memory_space=pltpu.MemorySpace.VMEM,
            ),
            input_output_aliases={0: 0},
            compiler_params=pltpu.CompilerParams(
                dimension_semantics=("parallel",),
            ),
        )(slab)

    if needs_pad:
        out = out.reshape(-1)[:total]
    return out.reshape(orig_shape)


if __name__ == "__main__":
    key = jax.random.PRNGKey(0)
    # Small NCHW input consistent with a conv-style module: B=2, C=4, H=W=16.
    x = jax.random.normal(key, (2, 4, 16, 16), dtype=jnp.float32)

    # Faithful module semantics: forward is a no-op returning None.
    assert model_forward(x) is None

    # Pallas smoke test 1: lane-exact shape -> single-block fast path,
    # no pad, no trailing slice.
    y = jax.block_until_ready(pallas_passthrough(x))
    assert y.shape == x.shape and y.dtype == x.dtype
    assert bool(jnp.all(y == x))

    # Pallas smoke test 2: awkward shape -> pad + slice path (still single block).
    x2 = jax.random.normal(jax.random.PRNGKey(0), (2, 3, 5, 7), dtype=jnp.float32)
    y2 = jax.block_until_ready(pallas_passthrough(x2))
    assert y2.shape == x2.shape and bool(jnp.all(y2 == x2))

    # Pallas smoke test 3: > one block -> gridded, lane-dense (block_rows, 128)
    # tiles with a divisor-based block size (no 8-row fallback cliff).
    x3 = jax.random.normal(jax.random.PRNGKey(0), (4, 8, 128, 130), dtype=jnp.float32)
    y3 = jax.block_until_ready(pallas_passthrough(x3))
    assert y3.shape == x3.shape and bool(jnp.all(y3 == x3))

    print("KERNEL_OK")
</pallas_src>

<mosaic_0001>
module attributes {stable_mosaic.version = 11 : i64} {
  func.func @_copy_kernel(%arg0: memref<16x128xf32, #tpu.memory_space<vmem>>, %arg1: memref<16x128xf32, #tpu.memory_space<vmem>>) attributes {dimension_semantics = [], scalar_prefetch = 0 : i64, scratch_operands = 0 : i64, tpu.core_type = #tpu.core_type<tc>} {
    %c0 = arith.constant 0 : index
    %c0_0 = arith.constant 0 : index
    %0 = vector.load %arg0[%c0, %c0_0] : memref<16x128xf32, #tpu.memory_space<vmem>>, vector<16x128xf32>
    %c0_1 = arith.constant 0 : index
    %c0_2 = arith.constant 0 : index
    %1 = vector.load %arg1[%c0_1, %c0_2] : memref<16x128xf32, #tpu.memory_space<vmem>>, vector<16x128xf32>
    tpu.vector_store %arg1[%c0_1, %c0_2], %0 {strides = array<i32>} : memref<16x128xf32, #tpu.memory_space<vmem>>, vector<16x128xf32>,
    return
  }
}

</mosaic_0001>

<llo_original>
// kernel: pallas_passthrough.1
$region0: #{pallas_passthrough.1}
  #allocation0 [shape = 'u32[]', space=smem, size = 0x4, offset = 0x4, fixed_abs, tag = 'smem constant byte address 0x4 - core index']
  #allocation1 [shape = 'u32[144,128]{1,0:T(1,128)}', space=vmem, size = 0x12000, scoped, tag = 'internal scratch']
  %s0 = inlined_call_operand.vmem [shape: f32[16,128], index: 0, kind: input, shape index: {}, may-alias: {0,1}]
  %s1 = inlined_call_operand.vmem [shape: f32[16,128], index: 1, kind: output, shape index: {}, may-alias: {0,1}]
  %s2 = sld [smem:[#allocation0]]
  $region14: #{pallas_passthrough.1} parent=0
    _
  %s4 = ssub.s32 1, %s2
  %s5 = scalar_select 0, %s4, %s2
  // Predicated region
  $region2: #{pallas_passthrough.1} parent=0 // pred_check
    _
  $region3: #{pallas_passthrough.1} parent=0 // pred_check_branch
    %7 = sbr.rel (0) target = $region5
  $region4: #{pallas_passthrough.1} parent=0 // pred_region
    _
  $region5: #{pallas_passthrough.1} parent=0 // pred_fallthru
    _
  %v8 = vld [vmem:[%s0] sm:$0xff]
  %v9 = vld [vmem:[%s0 + $0x8] sm:$0xff]
  %10 = vst [vmem:[%s1] sm:$0xff] %v8
  %11 = vst [vmem:[%s1 + $0x8] sm:$0xff] %v9
  // Predicated region
  $region6: #{pallas_passthrough.1} parent=0 // pred_check
    _
  $region7: #{pallas_passthrough.1} parent=0 // pred_check_branch
    %13 = sbr.rel (0) target = $region9
  $region8: #{pallas_passthrough.1} parent=0 // pred_region
    _
  $region9: #{pallas_passthrough.1} parent=0 // pred_fallthru
    _
  // Predicated region
  $region10: #{pallas_passthrough.1} parent=0 // pred_check
    _
  $region11: #{pallas_passthrough.1} parent=0 // pred_check_branch
    %15 = sbr.rel (0) target = $region13
  $region12: #{pallas_passthrough.1} parent=0 // pred_region
    _
  $region13: #{pallas_passthrough.1} parent=0 // pred_fallthru
    _

</llo_original>
